<compile_context>
chip_gen: v6e
topology: v6e:2x2x1
jax: 0.10.0
libtpu: 0.0.40
codegen_flags: <defaults>
</compile_context>

<pallas_src>
import functools

import jax
import jax.numpy as jnp
from jax.experimental import pallas as pl
from jax.experimental.pallas import tpu as pltpu

# Set to jax.lax.Precision.HIGHEST for strict fp32 contraction parity with
# cuTENSOR fp32 einsum (~3x MXU cost).  Default (None) uses the MXU's native
# reduced-precision f32 path; the tolerances in the self-test reflect that.
_F32_PRECISION = None


# ---------------------------------------------------------------------------
# helpers
# ---------------------------------------------------------------------------
def _round_up(x, m):
    return ((x + m - 1) // m) * m


def _vmem_capacity_bytes():
    """Physical VMEM of the current TPU generation (conservative fallback)."""
    try:
        return int(pltpu.get_tpu_info().vmem_capacity_bytes)
    except Exception:
        return 64 * 1024 * 1024  # v7x per-TensorCore size: safe on all gens


def _tpu_generation():
    try:
        kind = jax.devices()[0].device_kind.lower()
    except Exception:
        return "other"
    if "v5 lite" in kind or "v5e" in kind or "v5lite" in kind:
        return "v5e"
    if "v6" in kind:
        return "v6e"
    if "v7" in kind or "7x" in kind:
        return "v7x"
    return "other"


def _pick_tile(size, align, cap):
    """Pick a tile for one dimension.

    If the align-rounded dim fits under `cap`, use the whole dim (single tile,
    no intra-dim padding beyond alignment and no per-step re-reads).  Otherwise
    pick the largest multiple of `align` <= cap whose padding overhead is
    <= 1/8 of the dim; if none qualifies, pick the padding-minimizing one.
    """
    size_a = _round_up(max(size, 1), align)
    if size_a <= cap:
        return size_a
    max_c = cap - (cap % align)
    best = None
    for cand in range(max_c, align - 1, -align):
        pad = _round_up(size_a, cand) - size_a
        if pad * 8 <= size_a:
            return cand
        if best is None or pad < best[1]:
            best = (cand, pad)
    return best[0]


def _choose_tiles(B, M, N, K, a_bytes, b_bytes, o_bytes, budget, gen):
    """Pick (bb, tm, tn, tk): batch-block and M/N/K tile sizes."""
    # Sub-32-bit dtypes pack along sublanes: keep tm a multiple of the packing.
    m_align = {4: 8, 2: 16, 1: 32}.get(min(a_bytes, b_bytes), 8)

    if gen == "v5e":
        # v5e is compute-bound already at 256-512 tiles; bigger buys little.
        tm_cap, tn_cap, tk_cap = 512, 512, 512
    else:
        # v6e / v7x: fewer N-tiles -> fewer HBM re-reads of A, fewer K steps
        # amortize the ~0.35us per-grid-step overhead on the fast MXUs.
        tm_cap, tn_cap, tk_cap = 512, 1024, 1024

    tm = _pick_tile(M, m_align, tm_cap)
    tn = _pick_tile(N, 128, tn_cap)
    tk = _pick_tile(K, 128, tk_cap)

    bb = 1
    if tm < 128 and B > 1:
        bb = max(1, min(B, 256 // tm))

    def usage(bb_, tm_, tn_, tk_):
        acc = 0 if o_bytes == 4 else bb_ * tm_ * tn_ * 4  # f32 scratch only for
        return (2 * bb_ * tm_ * tk_ * a_bytes              # narrow outputs
                + 2 * bb_ * tk_ * tn_ * b_bytes
                + 2 * bb_ * tm_ * tn_ * o_bytes
                + acc)

    # Shrink until the double-buffered working set fits the VMEM budget.
    while usage(bb, tm, tn, tk) > budget:
        if tk > 128:
            tk = _pick_tile(K, 128, max(128, tk // 2))
        elif bb > 1:
            bb = max(1, bb // 2)
        elif tn > 128:
            tn = _pick_tile(N, 128, max(128, tn // 2))
        elif tm > m_align:
            tm = _pick_tile(M, m_align, max(m_align, tm // 2))
        else:
            break
    return bb, tm, tn, tk


def _pad_to(x, target):
    pads = [(0, t - s) for s, t in zip(x.shape, target)]
    if any(p for _, p in pads):
        x = jnp.pad(x, pads)
    return x


# ---------------------------------------------------------------------------
# Pallas kernels: batched matmul, grid = (B, M, N, K) tiles, K is reduction
# ---------------------------------------------------------------------------
def _tile_matmul(a, b):
    if a.ndim == 2:
        return jnp.dot(a, b, preferred_element_type=jnp.float32,
                       precision=_F32_PRECISION)
    return jax.lax.dot_general(
        a, b, dimension_numbers=(((2,), (1,)), ((0,), (0,))),
        preferred_element_type=jnp.float32, precision=_F32_PRECISION)


def _bmm_kernel_single(a_ref, b_ref, o_ref):
    # K fits in one step: no accumulation state at all.
    o_ref[...] = _tile_matmul(a_ref[...], b_ref[...]).astype(o_ref.dtype)


def _bmm_kernel_f32_acc(a_ref, b_ref, o_ref):
    # f32 output: accumulate directly into the output block (it stays resident
    # across the K axis since its index_map ignores k) -- no scratch, no extra
    # VMEM->VMEM copy.
    @pl.when(pl.program_id(3) == 0)
    def _init():
        o_ref[...] = jnp.zeros_like(o_ref)

    o_ref[...] += _tile_matmul(a_ref[...], b_ref[...])


def _bmm_kernel_scratch_acc(a_ref, b_ref, o_ref, acc_ref):
    # Narrow (bf16/f16) output: accumulate in an f32 scratch, cast on the last
    # K step.
    @pl.when(pl.program_id(3) == 0)
    def _init():
        acc_ref[...] = jnp.zeros_like(acc_ref)

    acc_ref[...] += _tile_matmul(a_ref[...], b_ref[...])

    @pl.when(pl.program_id(3) == pl.num_programs(3) - 1)
    def _finalize():
        o_ref[...] = acc_ref[...].astype(o_ref.dtype)


def pallas_bmm(a, b):
    """Batched matmul on the MXU.  a: (B, M, K), b: (B, K, N) -> (B, M, N)."""
    B, M, K = a.shape
    Bb, Kb, N = b.shape
    assert B == Bb and K == Kb

    out_dtype = jnp.result_type(a.dtype, b.dtype)
    a_bytes = a.dtype.itemsize
    b_bytes = b.dtype.itemsize
    o_bytes = jnp.dtype(out_dtype).itemsize

    cap = _vmem_capacity_bytes()
    gen = _tpu_generation()
    budget = int(cap * 0.40)
    bb, tm, tn, tk = _choose_tiles(B, M, N, K, a_bytes, b_bytes, o_bytes,
                                   budget, gen)

    Bp = _round_up(B, bb)
    Mp = _round_up(max(M, 1), tm)
    Np = _round_up(max(N, 1), tn)
    Kp = _round_up(max(K, 1), tk)

    a = _pad_to(a, (Bp, Mp, Kp))   # no-op when shapes already divide
    b = _pad_to(b, (Bp, Kp, Np))

    grid = (Bp // bb, Mp // tm, Np // tn, Kp // tk)
    kt = grid[3]
    squeeze = bb == 1

    bdim = None if squeeze else bb  # pl.Squeezed() batch -> 2-D tiles in-kernel
    a_spec = pl.BlockSpec((bdim, tm, tk), lambda bi, i, j, k: (bi, i, k))
    b_spec = pl.BlockSpec((bdim, tk, tn), lambda bi, i, j, k: (bi, k, j))
    o_spec = pl.BlockSpec((bdim, tm, tn), lambda bi, i, j, k: (bi, i, j))

    if kt == 1:
        kernel = _bmm_kernel_single
        scratch = []
    elif o_bytes == 4:
        kernel = _bmm_kernel_f32_acc
        scratch = []
    else:
        kernel = _bmm_kernel_scratch_acc
        acc_shape = (tm, tn) if squeeze else (bb, tm, tn)
        scratch = [pltpu.VMEM(acc_shape, jnp.float32)]

    # v7x has only 64 MiB VMEM per TensorCore: cap the limit at 48 MiB to keep
    # headroom for Mosaic internal scratch; on 128 MiB parts stay under 100 MiB.
    if cap <= 96 * 1024 * 1024:
        vmem_limit = min(int(cap * 0.75), 48 * 1024 * 1024)
    else:
        vmem_limit = min(int(cap * 0.85), 100 * 1024 * 1024)

    cost = pl.CostEstimate(
        flops=2 * Bp * Mp * Np * Kp,
        transcendentals=0,
        bytes_accessed=(a.size * a_bytes + b.size * b_bytes
                        + Bp * Mp * Np * o_bytes),
    )

    out = pl.pallas_call(
        kernel,
        out_shape=jax.ShapeDtypeStruct((Bp, Mp, Np), out_dtype),
        grid_spec=pltpu.PrefetchScalarGridSpec(
            num_scalar_prefetch=0,
            grid=grid,
            in_specs=[a_spec, b_spec],
            out_specs=o_spec,
            scratch_shapes=scratch,
        ),
        compiler_params=pltpu.CompilerParams(
            # "parallel" axes let Mosaic shard batch/M/N across TensorCores on
            # v7x (2 TCs/chip); K is the reduction -> "arbitrary", innermost.
            dimension_semantics=("parallel", "parallel", "parallel",
                                 "arbitrary"),
            vmem_limit_bytes=vmem_limit,
        ),
        cost_estimate=cost,
    )(a, b)

    if (Bp, Mp, Np) != (B, M, N):
        out = out[:B, :M, :N]
    return out


# ---------------------------------------------------------------------------
# Glue: canonicalize an arbitrary binary einsum to the batched matmul kernel
# ---------------------------------------------------------------------------
def _normalize_equation(equation):
    eq = equation.replace(" ", "")
    if "." in eq:
        raise NotImplementedError("ellipsis ('...') is not supported")
    if "->" in eq:
        lhs, out_modes = eq.split("->")
    else:
        lhs = eq
        counts = {}
        for m in lhs.replace(",", ""):
            counts[m] = counts.get(m, 0) + 1
        out_modes = "".join(sorted(m for m, c in counts.items() if c == 1))
    return lhs, out_modes


def einsum_pallas(equation, x0, x1):
    """Binary einsum, e.g. 'bij,bjk->bik', with the contraction on the MXU."""
    lhs, out_modes = _normalize_equation(equation)
    if "," not in lhs:
        raise NotImplementedError("unary einsum is not supported here")
    ma, mb = lhs.split(",")
    if len(set(ma)) != len(ma) or len(set(mb)) != len(mb):
        # TODO(synk): repeated modes within one operand (diagonals) unsupported.
        raise NotImplementedError("repeated modes within one operand")
    if len(set(out_modes)) != len(out_modes) or not set(out_modes) <= set(ma + mb):
        raise ValueError("invalid output subscripts")
    if len(ma) != x0.ndim or len(mb) != x1.ndim:
        raise ValueError("subscripts do not match operand ranks")

    xla_eq = f"{ma},{mb}->{out_modes}"

    # Integer / bool / f64 dtypes: the MXU accumulates in f32 (v7x has no int
    # MXU path), so fall back to XLA to preserve exact semantics.
    if not (jnp.issubdtype(x0.dtype, jnp.floating)
            and jnp.issubdtype(x1.dtype, jnp.floating)
            and x0.dtype.itemsize <= 4 and x1.dtype.itemsize <= 4):
        return jnp.einsum(xla_eq, x0, x1)

    sizes = {}
    for modes, arr in ((ma, x0), (mb, x1)):
        for m, s in zip(modes, arr.shape):
            sizes[m] = s

    batch = [m for m in ma if m in mb and m in out_modes]
    contract = [m for m in ma if m in mb and m not in out_modes]
    free_a = [m for m in ma if m not in mb and m in out_modes]
    free_b = [m for m in mb if m not in ma and m in out_modes]
    sum_a = [m for m in ma if m not in mb and m not in out_modes]
    sum_b = [m for m in mb if m not in ma and m not in out_modes]

    def prod(ms):
        return functools.reduce(lambda a, b: a * b, (sizes[m] for m in ms), 1)

    Bsz, Msz, Ksz, Nsz = prod(batch), prod(free_a), prod(contract), prod(free_b)

    # Degenerate / pathological-for-MXU problems go to XLA: zero-size dims,
    # near-empty contraction, or tiny M and N with a real batch (would leave
    # >97% of the 256-tall MXU idle every grid step).
    if (min(Bsz, Msz, Ksz, Nsz) == 0 or Ksz < 8
            or (Msz <= 64 and Nsz <= 64 and Bsz > 1)):
        return jnp.einsum(xla_eq, x0, x1)

    if sum_a:  # modes only in A and absent from the output: pre-reduce (glue)
        x0 = jnp.sum(x0, axis=tuple(ma.index(m) for m in sum_a))
        ma = "".join(m for m in ma if m not in sum_a)
    if sum_b:
        x1 = jnp.sum(x1, axis=tuple(mb.index(m) for m in sum_b))
        mb = "".join(m for m in mb if m not in sum_b)

    # Canonicalize both operands to the kernel's bmk / bkn layouts.  The (rare)
    # transpose is paid once here in HBM so every MXU step inside the kernel is
    # lane-dense with no per-step XLU relayouts.
    def to_matrix(x, modes, order, shape):
        perm = [modes.index(m) for m in order]
        if perm != list(range(len(modes))):
            x = jnp.transpose(x, perm)
        return x.reshape(shape)

    a_arr = to_matrix(x0, ma, batch + free_a + contract, (Bsz, Msz, Ksz))
    b_arr = to_matrix(x1, mb, batch + contract + free_b, (Bsz, Ksz, Nsz))

    o = pallas_bmm(a_arr, b_arr)

    o = o.reshape([sizes[m] for m in batch + free_a + free_b])
    kernel_order = batch + free_a + free_b
    perm_out = [kernel_order.index(m) for m in out_modes]
    if perm_out != list(range(len(perm_out))):
        o = jnp.transpose(o, perm_out)
    return o


class Einsum:
    """JAX/Pallas equivalent of the PyTorch Einsum module (binary forward)."""

    def __init__(self, equation):
        self.equation = equation

    def __call__(self, input_0, input_1):
        return einsum_pallas(self.equation, input_0, input_1)


# ---------------------------------------------------------------------------
if __name__ == "__main__":
    key = jax.random.PRNGKey(0)
    keys = jax.random.split(key, 10)

    def check(eq, x, y, atol=1e-3, rtol=1e-3):
        out = jax.block_until_ready(Einsum(eq)(x, y))
        ref = jnp.einsum(eq, x, y)
        assert out.shape == ref.shape and out.dtype == ref.dtype, (
            eq, out.shape, out.dtype, ref.shape, ref.dtype)
        assert jnp.allclose(out.astype(jnp.float32), ref.astype(jnp.float32),
                            atol=atol, rtol=rtol), f"mismatch vs jnp.einsum: {eq}"

    # 1) batched matmul (canonical use case of the module)
    check("bij,bjk->bik",
          jax.random.normal(keys[0], (2, 8, 256), jnp.float32),
          jax.random.normal(keys[1], (2, 256, 128), jnp.float32))

    # 2) plain matmul with unaligned shapes (padding + squeezed batch path)
    check("ik,kj->ij",
          jax.random.normal(keys[2], (64, 96), jnp.float32),
          jax.random.normal(keys[3], (96, 72), jnp.float32))

    # 3) transposed contraction (one-time glue transpose into bmk/bkn)
    check("bji,bjk->bik",
          jax.random.normal(keys[4], (2, 64, 72), jnp.float32),
          jax.random.normal(keys[5], (2, 64, 40), jnp.float32))

    # 4) multi-K-step path: f32 accumulates directly into the output block
    check("mk,kn->mn",
          jax.random.normal(keys[6], (64, 1536), jnp.float32),
          jax.random.normal(keys[7], (1536, 128), jnp.float32),
          atol=1e-2, rtol=1e-2)

    # 5) bf16 path (f32 scratch accumulator, bf16 store on the last K step)
    check("mk,kn->mn",
          jax.random.normal(keys[8], (64, 1536), jnp.bfloat16),
          jax.random.normal(keys[9], (1536, 128), jnp.bfloat16),
          atol=1.0, rtol=5e-2)

    print("KERNEL_OK")
</pallas_src>

<mosaic_0001>
module attributes {stable_mosaic.version = 11 : i64} {
  func.func @_bmm_kernel_single(%arg0: i32, %arg1: i32, %arg2: i32, %arg3: i32, %arg4: memref<2x8x256xf32, #tpu.memory_space<vmem>>, %arg5: memref<2x256x128xf32, #tpu.memory_space<vmem>>, %arg6: memref<2x8x128xf32, #tpu.memory_space<vmem>>) attributes {dimension_semantics = [#tpu.dimension_semantics<parallel>, #tpu.dimension_semantics<parallel>, #tpu.dimension_semantics<parallel>, #tpu.dimension_semantics<arbitrary>], iteration_bounds = array<i64: 1, 1, 1, 1>, scalar_prefetch = 0 : i64, scratch_operands = 0 : i64, tpu.core_type = #tpu.core_type<tc>, window_params = [{transform_indices = @transform_0, window_bounds = array<i64: 2, 8, 256>}, {transform_indices = @transform_1, window_bounds = array<i64: 2, 256, 128>}, {transform_indices = @transform_2, window_bounds = array<i64: 2, 8, 128>}]} {
    %c0 = arith.constant 0 : index
    %c0_0 = arith.constant 0 : index
    %c0_1 = arith.constant 0 : index
    %0 = vector.load %arg4[%c0, %c0_0, %c0_1] : memref<2x8x256xf32, #tpu.memory_space<vmem>>, vector<2x8x256xf32>
    %c0_2 = arith.constant 0 : index
    %c0_3 = arith.constant 0 : index
    %c0_4 = arith.constant 0 : index
    %1 = vector.load %arg5[%c0_2, %c0_3, %c0_4] : memref<2x256x128xf32, #tpu.memory_space<vmem>>, vector<2x256x128xf32>
    %cst = arith.constant dense<0.000000e+00> : vector<2x8x128xf32>
    %2 = tpu.matmul %0, %1, %cst {dimension_numbers = #tpu.dot_dimension_numbers<[2], [1], [1], [2], [0, 0, 0, 1, 1, 2], [0], [0]>} : vector<2x8x256xf32>, vector<2x256x128xf32>, vector<2x8x128xf32> -> vector<2x8x128xf32>
    %c0_5 = arith.constant 0 : index
    %c0_6 = arith.constant 0 : index
    %c0_7 = arith.constant 0 : index
    %3 = vector.load %arg6[%c0_5, %c0_6, %c0_7] : memref<2x8x128xf32, #tpu.memory_space<vmem>>, vector<2x8x128xf32>
    tpu.vector_store %arg6[%c0_5, %c0_6, %c0_7], %2 {strides = array<i32>} : memref<2x8x128xf32, #tpu.memory_space<vmem>>, vector<2x8x128xf32>,
    return
  }
  func.func @transform_0(%arg0: i32, %arg1: i32, %arg2: i32, %arg3: i32) -> (i32, i32, i32) {
    %c0_i32 = arith.constant 0 : i32
    return %arg0, %arg1, %arg3 : i32, i32, i32
  }
  func.func @transform_1(%arg0: i32, %arg1: i32, %arg2: i32, %arg3: i32) -> (i32, i32, i32) {
    %c0_i32 = arith.constant 0 : i32
    return %arg0, %arg3, %arg2 : i32, i32, i32
  }
  func.func @transform_2(%arg0: i32, %arg1: i32, %arg2: i32, %arg3: i32) -> (i32, i32, i32) {
    %c0_i32 = arith.constant 0 : i32
    return %arg0, %arg1, %arg2 : i32, i32, i32
  }
}

</mosaic_0001>

<llo_original>
// kernel: tpu_custom_call.1
$region0: #{tpu_custom_call.1}
  #allocation0 [shape = 'u32[]', space=smem, size = 0x4, offset = 0x4, fixed_abs, tag = 'smem constant byte address 0x4 - core index']
  #allocation1 [shape = 'u32[144,128]{1,0:T(1,128)}', space=vmem, size = 0x12000, scoped, tag = 'internal scratch']
  %s0 = inlined_call_operand.hbm [shape: f32[2,8,256], index: 0, kind: input, shape index: {}]
  %s1 = inlined_call_operand.hbm [shape: f32[2,256,128], index: 1, kind: input, shape index: {}]
  %s2 = inlined_call_operand.hbm [shape: f32[2,8,128], index: 2, kind: output, shape index: {}]
  %s3 = sld [smem:[#allocation0]]
  $region26: #{tpu_custom_call.1} parent=0
    _
  %s5 = ssub.s32 1, %s3
  %s6 = scalar_select 0, %s5, %s3
  $region1: #{tpu_custom_call.1} parent=0
    #allocation2 [shape = 'u8[16384]{0}', space=vmem, size = 0x4000, scoped, tag = 'input window, operand 0, single buffered']
    #allocation3 [shape = 's32[1]{0}', space=sflag, size = 0x4, scoped, tag = 'scoped memory for tpu_custom_call.1']
    #allocation4 [shape = 's32[1]{0}', space=sflag, size = 0x4, scoped, tag = 'scoped memory for tpu_custom_call.1']
    #allocation5 [shape = 'u8[262144]{0}', space=vmem, size = 0x40000, scoped, tag = 'input window, operand 1, single buffered']
    #allocation6 [shape = 's32[1]{0}', space=sflag, size = 0x4, scoped, tag = 'scoped memory for tpu_custom_call.1']
    #allocation7 [shape = 'u8[8192]{0}', space=vmem, size = 0x2000, scoped, tag = 'output window, operand 0, single buffered']
    %7 = vsyncpa [#allocation3], 0
    %8 = vsyncpa [#allocation6], 0
    %9 = vsyncpa [#allocation4], 0
    // Predicated region
    $region2: #{tpu_custom_call.1} parent=1 // pred_check
      _
    $region3: #{tpu_custom_call.1} parent=1 // pred_check_branch
      %11 = sbr.rel (0) target = $region5
    $region4: #{tpu_custom_call.1} parent=1 // pred_region
      %s13 = ssub.s32 512, 512
      %14 = vsyncadd [#allocation3], %s13
      %s15 = sshll.u32 [#allocation2], 4
      %s16 = int_to_ptr.vmem [resolvable:$true] %s15
      %21 = dma.hbm_to_vmem [thread:$0]  %s0, 512, %s16, [#allocation3], 256, 256, 16
    $region5: #{tpu_custom_call.1} parent=1 // pred_fallthru
      _
    // Predicated region
    $region6: #{tpu_custom_call.1} parent=1 // pred_check
      _
    $region7: #{tpu_custom_call.1} parent=1 // pred_check_branch
      %23 = sbr.rel (0) target = $region9
    $region8: #{tpu_custom_call.1} parent=1 // pred_region
      %s25 = ssub.s32 8192, 8192
      %26 = vsyncadd [#allocation6], %s25
      %s27 = sshll.u32 [#allocation5], 4
      %s28 = int_to_ptr.vmem [resolvable:$true] %s27
      %33 = dma.hbm_to_vmem [thread:$0]  %s1, 8192, %s28, [#allocation6], 128, 128, 8
    $region9: #{tpu_custom_call.1} parent=1 // pred_fallthru
      _
    // Predicated region
    $region10: #{tpu_custom_call.1} parent=1 // pred_check
      _
    $region11: #{tpu_custom_call.1} parent=1 // pred_check_branch
      %35 = sbr.rel (0) target = $region13
    $region12: #{tpu_custom_call.1} parent=1 // pred_region
      %36 = dma.done [#allocation3], 512
    $region13: #{tpu_custom_call.1} parent=1 // pred_fallthru
      _
    // Predicated region
    $region14: #{tpu_custom_call.1} parent=1 // pred_check
      _
    $region15: #{tpu_custom_call.1} parent=1 // pred_check_branch
      %38 = sbr.rel (0) target = $region17
    $region16: #{tpu_custom_call.1} parent=1 // pred_region
      %39 = dma.done [#allocation6], 8192
    $region17: #{tpu_custom_call.1} parent=1 // pred_fallthru
      _
    %v40 = vld [vmem:[#allocation2] sm:$0xff]
    %v41 = vld [vmem:[#allocation2 + $0x8] sm:$0xff]
    %v42 = vld [vmem:[#allocation2 + $0x10] sm:$0xff]
    %v43 = vld [vmem:[#allocation2 + $0x18] sm:$0xff]
    %v44 = vld [vmem:[#allocation5] sm:$0xff]
    %v45 = vld [vmem:[#allocation5 + $0x8] sm:$0xff]
    %v46 = vld [vmem:[#allocation5 + $0x10] sm:$0xff]
    %v47 = vld [vmem:[#allocation5 + $0x18] sm:$0xff]
    %v48 = vld [vmem:[#allocation5 + $0x20] sm:$0xff]
    %v49 = vld [vmem:[#allocation5 + $0x28] sm:$0xff]
    %v50 = vld [vmem:[#allocation5 + $0x30] sm:$0xff]
    %v51 = vld [vmem:[#allocation5 + $0x38] sm:$0xff]
    %v52 = vld [vmem:[#allocation5 + $0x40] sm:$0xff]
    %v53 = vld [vmem:[#allocation5 + $0x48] sm:$0xff]
    %v54 = vld [vmem:[#allocation5 + $0x50] sm:$0xff]
    %v55 = vld [vmem:[#allocation5 + $0x58] sm:$0xff]
    %v56 = vld [vmem:[#allocation5 + $0x60] sm:$0xff]
    %v57 = vld [vmem:[#allocation5 + $0x68] sm:$0xff]
    %v58 = vld [vmem:[#allocation5 + $0x70] sm:$0xff]
    %v59 = vld [vmem:[#allocation5 + $0x78] sm:$0xff]
    %v60 = vld [vmem:[#allocation5 + $0x80] sm:$0xff]
    %v61 = vld [vmem:[#allocation5 + $0x88] sm:$0xff]
    %v62 = vld [vmem:[#allocation5 + $0x90] sm:$0xff]
    %v63 = vld [vmem:[#allocation5 + $0x98] sm:$0xff]
    %v64 = vld [vmem:[#allocation5 + $0xa0] sm:$0xff]
    %v65 = vld [vmem:[#allocation5 + $0xa8] sm:$0xff]
    %v66 = vld [vmem:[#allocation5 + $0xb0] sm:$0xff]
    %v67 = vld [vmem:[#allocation5 + $0xb8] sm:$0xff]
    %v68 = vld [vmem:[#allocation5 + $0xc0] sm:$0xff]
    %v69 = vld [vmem:[#allocation5 + $0xc8] sm:$0xff]
    %v70 = vld [vmem:[#allocation5 + $0xd0] sm:$0xff]
    %v71 = vld [vmem:[#allocation5 + $0xd8] sm:$0xff]
    %v72 = vld [vmem:[#allocation5 + $0xe0] sm:$0xff]
    %v73 = vld [vmem:[#allocation5 + $0xe8] sm:$0xff]
    %v74 = vld [vmem:[#allocation5 + $0xf0] sm:$0xff]
    %v75 = vld [vmem:[#allocation5 + $0xf8] sm:$0xff]
    %v76 = vld [vmem:[#allocation5 + $0x100] sm:$0xff]
    %v77 = vld [vmem:[#allocation5 + $0x108] sm:$0xff]
    %v78 = vld [vmem:[#allocation5 + $0x110] sm:$0xff]
    %v79 = vld [vmem:[#allocation5 + $0x118] sm:$0xff]
    %v80 = vld [vmem:[#allocation5 + $0x120] sm:$0xff]
    %v81 = vld [vmem:[#allocation5 + $0x128] sm:$0xff]
    %v82 = vld [vmem:[#allocation5 + $0x130] sm:$0xff]
    %v83 = vld [vmem:[#allocation5 + $0x138] sm:$0xff]
    %v84 = vld [vmem:[#allocation5 + $0x140] sm:$0xff]
    %v85 = vld [vmem:[#allocation5 + $0x148] sm:$0xff]
    %v86 = vld [vmem:[#allocation5 + $0x150] sm:$0xff]
    %v87 = vld [vmem:[#allocation5 + $0x158] sm:$0xff]
    %v88 = vld [vmem:[#allocation5 + $0x160] sm:$0xff]
    %v89 = vld [vmem:[#allocation5 + $0x168] sm:$0xff]
    %v90 = vld [vmem:[#allocation5 + $0x170] sm:$0xff]
    %v91 = vld [vmem:[#allocation5 + $0x178] sm:$0xff]
    %v92 = vld [vmem:[#allocation5 + $0x180] sm:$0xff]
    %v93 = vld [vmem:[#allocation5 + $0x188] sm:$0xff]
    %v94 = vld [vmem:[#allocation5 + $0x190] sm:$0xff]
    %v95 = vld [vmem:[#allocation5 + $0x198] sm:$0xff]
    %v96 = vld [vmem:[#allocation5 + $0x1a0] sm:$0xff]
    %v97 = vld [vmem:[#allocation5 + $0x1a8] sm:$0xff]
    %v98 = vld [vmem:[#allocation5 + $0x1b0] sm:$0xff]
    %v99 = vld [vmem:[#allocation5 + $0x1b8] sm:$0xff]
    %v100 = vld [vmem:[#allocation5 + $0x1c0] sm:$0xff]
    %v101 = vld [vmem:[#allocation5 + $0x1c8] sm:$0xff]
    %v102 = vld [vmem:[#allocation5 + $0x1d0] sm:$0xff]
    %v103 = vld [vmem:[#allocation5 + $0x1d8] sm:$0xff]
    %v104 = vld [vmem:[#allocation5 + $0x1e0] sm:$0xff]
    %v105 = vld [vmem:[#allocation5 + $0x1e8] sm:$0xff]
    %v106 = vld [vmem:[#allocation5 + $0x1f0] sm:$0xff]
    %v107 = vld [vmem:[#allocation5 + $0x1f8] sm:$0xff]
    %108 = vmatprep.subr.mxu0 0.0
    %109 = vmatpush1.msra.mxu0 %v59
    %110 = vmatprep.subr.mxu0 0.0
    %111 = vmatpush1.msra.mxu0 %v58
    %112 = vmatprep.subr.mxu0 0.0
    %113 = vmatpush1.msra.mxu0 %v57
    %114 = vmatprep.subr.mxu0 0.0
    %115 = vmatpush1.msra.mxu0 %v56
    %116 = vmatprep.subr.mxu0 0.0
    %117 = vmatpush1.msra.mxu0 %v55
    %118 = vmatprep.subr.mxu0 0.0
    %119 = vmatpush1.msra.mxu0 %v54
    %120 = vmatprep.subr.mxu0 0.0
    %121 = vmatpush1.msra.mxu0 %v53
    %122 = vmatprep.subr.mxu0 0.0
    %123 = vmatpush1.msra.mxu0 %v52
    %124 = vmatprep.subr.mxu0 0.0
    %125 = vmatpush1.msra.mxu0 %v51
    %126 = vmatprep.subr.mxu0 0.0
    %127 = vmatpush1.msra.mxu0 %v50
    %128 = vmatprep.subr.mxu0 0.0
    %129 = vmatpush1.msra.mxu0 %v49
    %130 = vmatprep.subr.mxu0 0.0
    %131 = vmatpush1.msra.mxu0 %v48
    %132 = vmatprep.subr.mxu0 0.0
    %133 = vmatpush1.msra.mxu0 %v47
    %134 = vmatprep.subr.mxu0 0.0
    %135 = vmatpush1.msra.mxu0 %v46
    %136 = vmatprep.subr.mxu0 0.0
    %137 = vmatpush1.msra.mxu0 %v45
    %138 = vmatprep.subr.mxu0 0.0
    %139 = vmatpush1.msra.mxu0 %v44
    %140 = vmatprep.subr.mxu0 0.0
    %141 = vmatpush2.msra.mxu0 %v75
    %142 = vmatprep.subr.mxu0 0.0
    %143 = vmatpush2.msra.mxu0 %v74
    %144 = vmatprep.subr.mxu0 0.0
    %145 = vmatpush2.msra.mxu0 %v73
    %146 = vmatprep.subr.mxu0 0.0
    %147 = vmatpush2.msra.mxu0 %v72
    %148 = vmatprep.subr.mxu0 0.0
    %149 = vmatpush2.msra.mxu0 %v71
    %150 = vmatprep.subr.mxu0 0.0
    %151 = vmatpush2.msra.mxu0 %v70
    %152 = vmatprep.subr.mxu0 0.0
    %153 = vmatpush2.msra.mxu0 %v69
    %154 = vmatprep.subr.mxu0 0.0
    %155 = vmatpush2.msra.mxu0 %v68
    %156 = vmatprep.subr.mxu0 0.0
    %157 = vmatpush2.msra.mxu0 %v67
    %158 = vmatprep.subr.mxu0 0.0
    %159 = vmatpush2.msra.mxu0 %v66
    %160 = vmatprep.subr.mxu0 0.0
    %161 = vmatpush2.msra.mxu0 %v65
    %162 = vmatprep.subr.mxu0 0.0
    %163 = vmatpush2.msra.mxu0 %v64
    %164 = vmatprep.subr.mxu0 0.0
    %165 = vmatpush2.msra.mxu0 %v63
    %166 = vmatprep.subr.mxu0 0.0
    %167 = vmatpush2.msra.mxu0 %v62
    %168 = vmatprep.subr.mxu0 0.0
    %169 = vmatpush2.msra.mxu0 %v61
    %170 = vmatprep.subr.mxu0 0.0
    %171 = vmatpush2.msra.mxu0 %v60
    %172 = vmatprep.mubr.f32.mxu0 %v41
    %173 = vmatmul.mubr.f32.gmra.mxu0 %v40
    %v174 = vpop.f32.mrf.mxu0
    %v175 = vadd.f32 0.0, %v174
    %v176 = vpop.f32.mrf.mxu0
    %177 = vdwg.mxu0
    %178 = vmatprep.subr.mxu0 0.0
    %179 = vmatpush1.msra.mxu0 %v91
    %180 = vmatprep.subr.mxu0 0.0
    %181 = vmatpush1.msra.mxu0 %v90
    %182 = vmatprep.subr.mxu0 0.0
    %183 = vmatpush1.msra.mxu0 %v89
    %184 = vmatprep.subr.mxu0 0.0
    %185 = vmatpush1.msra.mxu0 %v88
    %186 = vmatprep.subr.mxu0 0.0
    %187 = vmatpush1.msra.mxu0 %v87
    %188 = vmatprep.subr.mxu0 0.0
    %189 = vmatpush1.msra.mxu0 %v86
    %190 = vmatprep.subr.mxu0 0.0
    %191 = vmatpush1.msra.mxu0 %v85
    %192 = vmatprep.subr.mxu0 0.0
    %193 = vmatpush1.msra.mxu0 %v84
    %194 = vmatprep.subr.mxu0 0.0
    %195 = vmatpush1.msra.mxu0 %v83
    %196 = vmatprep.subr.mxu0 0.0
    %197 = vmatpush1.msra.mxu0 %v82
    %198 = vmatprep.subr.mxu0 0.0
    %199 = vmatpush1.msra.mxu0 %v81
    %200 = vmatprep.subr.mxu0 0.0
    %201 = vmatpush1.msra.mxu0 %v80
    %202 = vmatprep.subr.mxu0 0.0
    %203 = vmatpush1.msra.mxu0 %v79
    %204 = vmatprep.subr.mxu0 0.0
    %205 = vmatpush1.msra.mxu0 %v78
    %206 = vmatprep.subr.mxu0 0.0
    %207 = vmatpush1.msra.mxu0 %v77
    %208 = vmatprep.subr.mxu0 0.0
    %209 = vmatpush1.msra.mxu0 %v76
    %210 = vmatprep.subr.mxu0 0.0
    %211 = vmatpush2.msra.mxu0 %v107
    %212 = vmatprep.subr.mxu0 0.0
    %213 = vmatpush2.msra.mxu0 %v106
    %214 = vmatprep.subr.mxu0 0.0
    %215 = vmatpush2.msra.mxu0 %v105
    %216 = vmatprep.subr.mxu0 0.0
    %217 = vmatpush2.msra.mxu0 %v104
    %218 = vmatprep.subr.mxu0 0.0
    %219 = vmatpush2.msra.mxu0 %v103
    %220 = vmatprep.subr.mxu0 0.0
    %221 = vmatpush2.msra.mxu0 %v102
    %222 = vmatprep.subr.mxu0 0.0
    %223 = vmatpush2.msra.mxu0 %v101
    %224 = vmatprep.subr.mxu0 0.0
    %225 = vmatpush2.msra.mxu0 %v100
    %226 = vmatprep.subr.mxu0 0.0
    %227 = vmatpush2.msra.mxu0 %v99
    %228 = vmatprep.subr.mxu0 0.0
    %229 = vmatpush2.msra.mxu0 %v98
    %230 = vmatprep.subr.mxu0 0.0
    %231 = vmatpush2.msra.mxu0 %v97
    %232 = vmatprep.subr.mxu0 0.0
    %233 = vmatpush2.msra.mxu0 %v96
    %234 = vmatprep.subr.mxu0 0.0
    %235 = vmatpush2.msra.mxu0 %v95
    %236 = vmatprep.subr.mxu0 0.0
    %237 = vmatpush2.msra.mxu0 %v94
    %238 = vmatprep.subr.mxu0 0.0
    %239 = vmatpush2.msra.mxu0 %v93
    %240 = vmatprep.subr.mxu0 0.0
    %241 = vmatpush2.msra.mxu0 %v92
    %242 = vmatprep.mubr.f32.mxu0 %v43
    %243 = vmatmul.mubr.f32.gmra.mxu0 %v42
    %v244 = vpop.f32.mrf.mxu0
    %v245 = vadd.f32 0.0, %v244
    %v246 = vpop.f32.mrf.mxu0
    %247 = vdwg.mxu0
    %248 = vst [vmem:[#allocation7] sm:$0xff] %v175
    %249 = vst [vmem:[#allocation7 + $0x8] sm:$0xff] %v245
    // Predicated region
    $region18: #{tpu_custom_call.1} parent=1 // pred_check
      _
    $region19: #{tpu_custom_call.1} parent=1 // pred_check_branch
      %251 = sbr.rel (0) target = $region21
    $region20: #{tpu_custom_call.1} parent=1 // pred_region
      %s253 = ssub.s32 256, 256
      %254 = vsyncadd [#allocation4], %s253
      %s255 = sshll.u32 [#allocation7], 4
      %s256 = int_to_ptr.vmem [resolvable:$true] %s255
      %261 = dma.vmem_to_hbm [thread:$0]  %s256, 256, %s2, [#allocation4], 128, 128, 8
    $region21: #{tpu_custom_call.1} parent=1 // pred_fallthru
      _
    // Predicated region
    $region22: #{tpu_custom_call.1} parent=1 // pred_check
      _
    $region23: #{tpu_custom_call.1} parent=1 // pred_check_branch
      %263 = sbr.rel (0) target = $region25
    $region24: #{tpu_custom_call.1} parent=1 // pred_region
      %264 = dma.done [#allocation4], 256
    $region25: #{tpu_custom_call.1} parent=1 // pred_fallthru
      _
    %265 = vsyncpa [#allocation3], 1
    %266 = vsyncpa [#allocation6], 1
    %267 = vsyncpa [#allocation4], 1

</llo_original>
